<compile_context>
chip_gen: v7x
topology: tpu7x:2x2x1
jax: 0.10.0
libtpu: 0.0.40
codegen_flags: <defaults>
</compile_context>

<pallas_src>
import math
from functools import lru_cache

import numpy as np

import jax
import jax.numpy as jnp
from jax.experimental import pallas as pl
from jax.experimental.pallas import tpu as pltpu

# ---------------- QRNNCell hyper-parameters (module __init__) ----------------
INPUT_SIZE = 2          # len(cell.inout)
WORKSPACE_SIZE = 4      # len(cell.workspace)
STAGES = 2
ORDER = 2
DEGREE = 2
BIAS = math.pi / 2
# TODO(synk): FastQuantumNeuronLayer source is unavailable; assume the fast
# variant uses ancillas_for_order(order) == order - 1.
ANCILLAS = ORDER - 1

NUM_QUBITS = INPUT_SIZE + WORKSPACE_SIZE + ANCILLAS
D = 2 ** NUM_QUBITS          # Hilbert-space dimension (128 for this config)
G = 2 ** INPUT_SIZE          # number of inout measurement outcomes (4)
R = D // G                   # residual (workspace + ancilla) block size (32)
D2 = 2 * D                   # packed [re | im] state width (256)
PROBS_PAD = 128              # lane-dense probability slab width

BATCH = 2
SEQ = 5


# ------------------------------- fused kernel --------------------------------
def qrnn_seq_kernel(m_in_ref, m_meas_ref,            # scalar prefetch (SMEM) [T*B] 1-D
                    s0_ref, u_ref, msel_ref, e_ref,  # resident VMEM inputs
                    probs_ref, state_ref):           # outputs (state_ref carries state)
    t = pl.program_id(0)

    @pl.when(t == 0)
    def _():
        state_ref[...] = s0_ref[...]                 # ket0 batch

    prob_rows = []
    for b in range(BATCH):                           # BATCH is tiny & static -> unrolled
        base = t * BATCH + b
        m_in = m_in_ref[base]                        # input bit pattern   (SMEM scalar)
        m_ms = m_meas_ref[base]                      # measured pattern    (SMEM scalar)

        # Whole QRNNCell for this input pattern: one block-complex matmul
        #   [re | im] @ [[Ur, Ui], [-Ui, Ur]]
        s_new = jnp.dot(state_ref[b:b + 1, :], u_ref[m_in],
                        preferred_element_type=jnp.float32)           # [1, 2D]
        re = s_new[:, :D]
        im = s_new[:, D:]
        mag2 = re * re + im * im                                      # [1, D]

        # probabilities(batch, inout): outcome g in lane g of a 128-lane slab.
        prob_rows.append(jnp.dot(mag2, msel_ref[...],
                                 preferred_element_type=jnp.float32))  # [1, 128]

        # PostselectManyLayer(inout, m) + bitflip back to |0..0>:
        # project onto outcome m and move that block to block 0 (tiny resident
        # XOR-permutation/projection matrix).  Real & imag rows share one MXU
        # weight push: single [2, D] @ [D, D] matmul, then renormalize.
        ri = jnp.concatenate([re, im], axis=0)                        # [2, D]
        proj = jnp.dot(ri, e_ref[m_ms],
                       preferred_element_type=jnp.float32)            # [2, D]
        psel = jnp.sum(proj * proj)                                   # postselect prob
        inv = jax.lax.rsqrt(jnp.maximum(psel, 1e-30))
        state_ref[b:b + 1, :D] = proj[0:1, :] * inv
        state_ref[b:b + 1, D:] = proj[1:2, :] * inv

    # single lane-dense store of this step's probabilities for the whole batch
    probs_ref[...] = jnp.concatenate(prob_rows, axis=0).reshape(1, BATCH, PROBS_PAD)


@lru_cache(maxsize=None)
def _qrnn_seq_call(seq_len: int):
    grid_spec = pltpu.PrefetchScalarGridSpec(
        num_scalar_prefetch=2,                        # m_in, m_meas -> SMEM (1-D)
        grid=(seq_len,),
        in_specs=[
            pl.BlockSpec((BATCH, D2), lambda t, mi, mm: (0, 0)),         # s0
            pl.BlockSpec((G, D2, D2), lambda t, mi, mm: (0, 0, 0)),      # u_table
            pl.BlockSpec((D, PROBS_PAD), lambda t, mi, mm: (0, 0)),      # msel_pad
            pl.BlockSpec((G, D, D), lambda t, mi, mm: (0, 0, 0)),        # e_table
        ],
        out_specs=[
            pl.BlockSpec((1, BATCH, PROBS_PAD), lambda t, mi, mm: (t, 0, 0)),  # probs
            pl.BlockSpec((BATCH, D2), lambda t, mi, mm: (0, 0)),               # state
        ],
    )
    fn = pl.pallas_call(
        qrnn_seq_kernel,
        grid_spec=grid_spec,
        out_shape=(jax.ShapeDtypeStruct((seq_len, BATCH, PROBS_PAD), jnp.float32),
                   jax.ShapeDtypeStruct((BATCH, D2), jnp.float32)),
        compiler_params=pltpu.CompilerParams(dimension_semantics=("arbitrary",)),
    )
    return jax.jit(fn)


# ---------------------------- parameter setup ---------------------------------
def _random_unitary(rng, d):
    q, _ = np.linalg.qr(rng.standard_normal((d, d)))
    theta = rng.uniform(0.0, 2.0 * np.pi, size=d)
    return (np.cos(theta)[:, None] * q) + 1j * (np.sin(theta)[:, None] * q)


def _compose(layers):
    # layer_0 applied first with row-vector states: s @ L0 @ L1 @ ...
    u = np.eye(D, dtype=np.complex128)
    for layer in layers:
        u = u @ layer
    return u


def build_parameters():
    # TODO(synk): QuantumNeuronLayer / UnitaryLayer circuit constructions are not
    # provided; each sub-layer is approximated by a deterministic random unitary
    # on the full register, composed with the same structure as the module.
    rng = np.random.default_rng(0)
    u_input = _compose([_random_unitary(rng, D) for _ in range(WORKSPACE_SIZE)])
    kernel_layers = []
    for _ in range(STAGES):
        kernel_layers.append(_random_unitary(rng, D))            # UnitaryLayer(workspace)
        kernel_layers.extend(_random_unitary(rng, D) for _ in range(WORKSPACE_SIZE))
    u_kernel = _compose(kernel_layers)
    u_output = _compose([_random_unitary(rng, D) for _ in range(INPUT_SIZE)])

    idx = np.arange(D)
    p_mats = np.zeros((G, D, D), np.float64)   # bitflip of inout pattern m
    e_mats = np.zeros((G, D, D), np.float32)   # project on outcome m, shift to block 0
    for m in range(G):
        flipped = idx ^ (m * R)
        p_mats[m, idx, flipped] = 1.0
        in_block = (idx // R) == m
        e_mats[m, idx[in_block], flipped[in_block]] = 1.0

    # whole-cell unitary per input pattern: P_m . U_in . U_k . P_m . U_out,
    # block-complex packed for a single real matmul per step.
    u_table = np.zeros((G, D2, D2), np.float32)
    for m in range(G):
        u = p_mats[m] @ u_input @ u_kernel @ p_mats[m] @ u_output
        ur = u.real.astype(np.float32)
        ui = u.imag.astype(np.float32)
        u_table[m, :D, :D] = ur
        u_table[m, :D, D:] = ui
        u_table[m, D:, :D] = -ui
        u_table[m, D:, D:] = ur

    # probability selector padded lane-dense: probs_vec = |amp|^2 @ msel_pad
    msel_pad = np.zeros((D, PROBS_PAD), np.float32)
    for g in range(G):
        msel_pad[g * R:(g + 1) * R, g] = 1.0

    return dict(
        u_table=jnp.asarray(u_table),
        e_table=jnp.asarray(e_mats),
        msel=jnp.asarray(msel_pad),
        # host-side (numpy) copies for the pure-numpy reference check
        u_in=u_input, u_k=u_kernel, u_out=u_output, p_mats=p_mats,
    )


# ------------------------------ QRNN.forward ----------------------------------
def bitword_to_int(bits):
    bits = np.asarray(bits)
    weights = 2 ** np.arange(INPUT_SIZE - 1, -1, -1)
    return (bits * weights).sum(axis=-1).astype(np.int32)


def int_to_bitword(vals, dtype):
    vals = np.asarray(vals)
    return ((vals[..., None] >> np.arange(INPUT_SIZE - 1, -1, -1)) & 1).astype(dtype)


def qrnn_forward(inputs, targets, postselect_measurement, params, sample_key=None):
    inputs = np.asarray(inputs)
    targets = np.asarray(targets)
    assert inputs.shape == targets.shape, "inputs and targets have to have same shape"
    assert inputs.ndim in (2, 3), "unbatched input has to have dim 2, batched dim 3"
    was_batched = inputs.ndim == 3
    if not was_batched:
        inputs, targets = inputs[None], targets[None]
    assert inputs.shape[0] == BATCH and inputs.shape[-1] == INPUT_SIZE

    if isinstance(postselect_measurement, bool):
        _flag = postselect_measurement
        postselect_fn = lambda i, trgt: np.full((BATCH,), _flag, dtype=bool)
    else:
        postselect_fn = lambda i, trgt: np.asarray(postselect_measurement(i, trgt),
                                                   dtype=bool)

    # [B, T, K] -> [T, B, K]
    inputs_t = np.transpose(inputs, (1, 0, 2))
    targets_t = np.transpose(targets, (1, 0, 2))
    seq_len = inputs_t.shape[0]

    m_in = bitword_to_int(inputs_t)                       # [T, B]
    m_tgt = bitword_to_int(targets_t)                     # [T, B]
    ps_mask = np.stack([postselect_fn(i, targets_t[i]) for i in range(seq_len)])

    # ket0(num_qubits) copied over the batch, block-complex packed [re | im]
    s0 = jnp.zeros((BATCH, D2), jnp.float32).at[:, 0].set(1.0)

    if ps_mask.all():
        # Fast path (benchmark path): every measurement is a postselection on the
        # target, so the whole sequence is ONE fused kernel launch, no host syncs.
        m_meas = m_tgt
        probs_pad, _ = _qrnn_seq_call(seq_len)(
            jnp.asarray(m_in.reshape(-1), jnp.int32),
            jnp.asarray(m_meas.reshape(-1), jnp.int32),
            s0, params["u_table"], params["msel"], params["e_table"])
        probs_pad = np.asarray(probs_pad)                 # single device->host transfer
    else:
        # TODO(synk): sampled measurements feed back into the state, so this path
        # steps the same fused kernel one timestep at a time (probe launch to read
        # probs, relaunch with the chosen measurement).
        if sample_key is None:
            sample_key = jax.random.PRNGKey(1)
        call1 = _qrnn_seq_call(1)
        m_meas = np.zeros((seq_len, BATCH), np.int32)
        probs_rows = []
        state = s0
        for i in range(seq_len):
            mi = jnp.asarray(m_in[i].reshape(-1), jnp.int32)
            probe, _ = call1(mi, jnp.asarray(m_tgt[i].reshape(-1), jnp.int32), state,
                             params["u_table"], params["msel"], params["e_table"])
            p_i = np.asarray(probe)[0, :, :G]
            sample_key, sub = jax.random.split(sample_key)
            sampled = np.asarray(jax.random.categorical(
                sub, jnp.log(jnp.maximum(jnp.asarray(p_i), 1e-30)), axis=-1))
            m_meas[i] = np.where(ps_mask[i], m_tgt[i], sampled).astype(np.int32)
            probs_pad_i, state = call1(mi, jnp.asarray(m_meas[i].reshape(-1), jnp.int32),
                                       state, params["u_table"], params["msel"],
                                       params["e_table"])
            probs_rows.append(np.asarray(probs_pad_i)[0])
        probs_pad = np.stack(probs_rows)

    probs_tb = probs_pad[:, :, :G]                                        # [T, B, G]
    psel = np.take_along_axis(probs_tb, m_meas[:, :, None], axis=-1)[..., 0]
    min_postsel_prob = 1.0
    if ps_mask.any():
        min_postsel_prob = min(1.0, float(psel[ps_mask].min()))

    measured = np.transpose(int_to_bitword(m_meas, inputs.dtype), (1, 0, 2))  # [B, T, K]
    probs = jnp.asarray(np.transpose(probs_tb, (1, 2, 0)))                    # [B, G, T]
    measured = jnp.asarray(measured)
    if was_batched:
        return probs, measured, min_postsel_prob
    return probs[0], measured[0], min_postsel_prob


# -------------------------- pure-numpy reference ------------------------------
def _reference_forward(inputs, targets, params):
    """float64 step-by-step reference of the postselect-all path."""
    u_in, u_k, u_out = params["u_in"], params["u_k"], params["u_out"]
    p_mats = params["p_mats"]
    inputs_t = np.transpose(np.asarray(inputs), (1, 0, 2))
    targets_t = np.transpose(np.asarray(targets), (1, 0, 2))
    seq_len = inputs_t.shape[0]
    m_in = bitword_to_int(inputs_t)
    m_tg = bitword_to_int(targets_t)
    state = np.zeros((BATCH, D), np.complex128)
    state[:, 0] = 1.0
    probs = np.zeros((BATCH, G, seq_len))
    min_p = 1.0
    for i in range(seq_len):
        for b in range(BATCH):
            s = state[b]
            s = s @ p_mats[m_in[i, b]] @ u_in @ u_k @ p_mats[m_in[i, b]] @ u_out
            probs[b, :, i] = (np.abs(s) ** 2).reshape(G, R).sum(-1)
            m = m_tg[i, b]
            blk = s[m * R:(m + 1) * R]
            psel = float((np.abs(blk) ** 2).sum())
            min_p = min(min_p, psel)
            ns = np.zeros(D, np.complex128)
            ns[:R] = blk / math.sqrt(max(psel, 1e-30))
            state[b] = ns
    return probs, min_p


# ----------------------------------- main --------------------------------------
if __name__ == "__main__":
    key = jax.random.PRNGKey(0)
    k_in, k_tg = jax.random.split(key)
    inputs = jax.random.randint(k_in, (BATCH, SEQ, INPUT_SIZE), 0, 2, dtype=jnp.int32)
    targets = jax.random.randint(k_tg, (BATCH, SEQ, INPUT_SIZE), 0, 2, dtype=jnp.int32)

    params = build_parameters()
    probs, measured, min_p = qrnn_forward(inputs, targets, True, params)
    jax.block_until_ready(probs)
    jax.block_until_ready(measured)

    assert probs.shape == (BATCH, G, SEQ)
    assert measured.shape == (BATCH, SEQ, INPUT_SIZE)
    assert 0.0 <= min_p <= 1.0

    ref_probs, ref_min_p = _reference_forward(inputs, targets, params)
    np.testing.assert_allclose(np.asarray(probs), ref_probs, rtol=0.05, atol=0.02)
    assert abs(min_p - ref_min_p) < 0.02
    np.testing.assert_array_equal(np.asarray(measured), np.asarray(targets))

    print("KERNEL_OK")
</pallas_src>

<mosaic_0001>
module attributes {stable_mosaic.version = 11 : i64} {
  func.func @qrnn_seq_kernel(%arg0: i32, %arg1: memref<10xi32, #tpu.memory_space<smem>>, %arg2: memref<10xi32, #tpu.memory_space<smem>>, %arg3: memref<2x256xf32, #tpu.memory_space<vmem>>, %arg4: memref<4x256x256xf32, #tpu.memory_space<vmem>>, %arg5: memref<128x128xf32, #tpu.memory_space<vmem>>, %arg6: memref<4x128x128xf32, #tpu.memory_space<vmem>>, %arg7: memref<1x2x128xf32, #tpu.memory_space<vmem>>, %arg8: memref<2x256xf32, #tpu.memory_space<vmem>>) attributes {dimension_semantics = [#tpu.dimension_semantics<arbitrary>], iteration_bounds = array<i64: 5>, scalar_prefetch = 2 : i64, scratch_operands = 0 : i64, tpu.core_type = #tpu.core_type<tc>, window_params = [{pipeline_mode = #tpu.pipeline_mode<synchronous>, transform_indices = @transform_0, window_bounds = array<i64: 2, 256>}, {pipeline_mode = #tpu.pipeline_mode<synchronous>, transform_indices = @transform_1, window_bounds = array<i64: 4, 256, 256>}, {pipeline_mode = #tpu.pipeline_mode<synchronous>, transform_indices = @transform_2, window_bounds = array<i64: 128, 128>}, {pipeline_mode = #tpu.pipeline_mode<synchronous>, transform_indices = @transform_3, window_bounds = array<i64: 4, 128, 128>}, {transform_indices = @transform_4, window_bounds = array<i64: 1, 2, 128>}, {pipeline_mode = #tpu.pipeline_mode<synchronous>, transform_indices = @transform_5, window_bounds = array<i64: 2, 256>}]} {
    %c0_i32 = arith.constant 0 : i32
    %0 = arith.cmpi eq, %arg0, %c0_i32 : i32
    %1 = arith.extui %0 : i1 to i32
    %c0_i32_0 = arith.constant 0 : i32
    %2 = arith.cmpi ne, %1, %c0_i32_0 : i32
    scf.if %2 {
      %c0_36 = arith.constant 0 : index
      %c0_37 = arith.constant 0 : index
      %82 = vector.load %arg3[%c0_36, %c0_37] : memref<2x256xf32, #tpu.memory_space<vmem>>, vector<2x256xf32>
      %c0_38 = arith.constant 0 : index
      %c0_39 = arith.constant 0 : index
      %83 = vector.load %arg8[%c0_38, %c0_39] : memref<2x256xf32, #tpu.memory_space<vmem>>, vector<2x256xf32>
      tpu.vector_store %arg8[%c0_38, %c0_39], %82 {strides = array<i32>} : memref<2x256xf32, #tpu.memory_space<vmem>>, vector<2x256xf32>,
    } else {
    }
    %c2_i32 = arith.constant 2 : i32
    %3 = arith.muli %arg0, %c2_i32 : i32
    %c0_i32_1 = arith.constant 0 : i32
    %4 = arith.addi %3, %c0_i32_1 : i32
    %5 = arith.index_cast %4 : i32 to index
    %6 = memref.load %arg1[%5] : memref<10xi32, #tpu.memory_space<smem>>
    %7 = arith.index_cast %4 : i32 to index
    %8 = memref.load %arg2[%7] : memref<10xi32, #tpu.memory_space<smem>>
    %c0 = arith.constant 0 : index
    %c0_2 = arith.constant 0 : index
    %9 = vector.load %arg8[%c0, %c0_2] : memref<2x256xf32, #tpu.memory_space<vmem>>, vector<1x256xf32>
    %10 = arith.index_cast %6 : i32 to index
    %c0_3 = arith.constant 0 : index
    %c0_4 = arith.constant 0 : index
    %11 = vector.load %arg4[%10, %c0_3, %c0_4] : memref<4x256x256xf32, #tpu.memory_space<vmem>>, vector<1x256x256xf32>
    %12 = vector.shape_cast %11 : vector<1x256x256xf32> to vector<256x256xf32>
    %cst = arith.constant dense<0.000000e+00> : vector<1x256xf32>
    %13 = tpu.matmul %9, %12, %cst {dimension_numbers = #tpu.dot_dimension_numbers<[1], [0], [0], [1], [0, 0, 1, 1], [], []>} : vector<1x256xf32>, vector<256x256xf32>, vector<1x256xf32> -> vector<1x256xf32>
    %14 = vector.extract_strided_slice %13 {offsets = [0, 0], sizes = [1, 128], strides = [1, 1]} : vector<1x256xf32> to vector<1x128xf32>
    %15 = vector.extract_strided_slice %13 {offsets = [0, 128], sizes = [1, 128], strides = [1, 1]} : vector<1x256xf32> to vector<1x128xf32>
    %16 = arith.mulf %14, %14 : vector<1x128xf32>
    %17 = arith.mulf %15, %15 : vector<1x128xf32>
    %18 = arith.addf %16, %17 : vector<1x128xf32>
    %c0_5 = arith.constant 0 : index
    %c0_6 = arith.constant 0 : index
    %19 = vector.load %arg5[%c0_5, %c0_6] : memref<128x128xf32, #tpu.memory_space<vmem>>, vector<128x128xf32>
    %cst_7 = arith.constant dense<0.000000e+00> : vector<1x128xf32>
    %20 = tpu.matmul %18, %19, %cst_7 {dimension_numbers = #tpu.dot_dimension_numbers<[1], [0], [0], [1], [0, 0, 1, 1], [], []>} : vector<1x128xf32>, vector<128x128xf32>, vector<1x128xf32> -> vector<1x128xf32>
    %21 = tpu.concatenate %14, %15 in 0 : vector<1x128xf32>, vector<1x128xf32> -> vector<2x128xf32>
    %22 = arith.index_cast %8 : i32 to index
    %c0_8 = arith.constant 0 : index
    %c0_9 = arith.constant 0 : index
    %23 = vector.load %arg6[%22, %c0_8, %c0_9] : memref<4x128x128xf32, #tpu.memory_space<vmem>>, vector<1x128x128xf32>
    %24 = vector.shape_cast %23 : vector<1x128x128xf32> to vector<128x128xf32>
    %cst_10 = arith.constant dense<0.000000e+00> : vector<2x128xf32>
    %25 = tpu.matmul %21, %24, %cst_10 {dimension_numbers = #tpu.dot_dimension_numbers<[1], [0], [0], [1], [0, 0, 1, 1], [], []>} : vector<2x128xf32>, vector<128x128xf32>, vector<2x128xf32> -> vector<2x128xf32>
    %26 = arith.mulf %25, %25 : vector<2x128xf32>
    %27 = vector.shape_cast %26 : vector<2x128xf32> to vector<1x2x128xf32>
    %cst_11 = arith.constant dense<0.000000e+00> : vector<1xf32>
    %28 = vector.multi_reduction <add>, %27, %cst_11 [1, 2] : vector<1x2x128xf32> to vector<1xf32>
    %29 = vector.shape_cast %28 : vector<1xf32> to vector<1x1x1xf32>
    %30 = vector.extract %29[0, 0, 0] : f32 from vector<1x1x1xf32>
    %cst_12 = arith.constant 1.000000e-30 : f32
    %31 = arith.maximumf %30, %cst_12 : f32
    %32 = math.rsqrt %31 : f32
    %33 = vector.extract_strided_slice %25 {offsets = [0, 0], sizes = [1, 128], strides = [1, 1]} : vector<2x128xf32> to vector<1x128xf32>
    %34 = vector.broadcast %32 : f32 to vector<1x128xf32>
    %35 = arith.mulf %33, %34 : vector<1x128xf32>
    %c0_13 = arith.constant 0 : index
    %c0_14 = arith.constant 0 : index
    %36 = vector.load %arg8[%c0_13, %c0_14] : memref<2x256xf32, #tpu.memory_space<vmem>>, vector<1x128xf32>
    tpu.vector_store %arg8[%c0_13, %c0_14], %35 {strides = array<i32>} : memref<2x256xf32, #tpu.memory_space<vmem>>, vector<1x128xf32>,
    %37 = vector.extract_strided_slice %25 {offsets = [1, 0], sizes = [1, 128], strides = [1, 1]} : vector<2x128xf32> to vector<1x128xf32>
    %38 = vector.broadcast %32 : f32 to vector<1x128xf32>
    %39 = arith.mulf %37, %38 : vector<1x128xf32>
    %c0_15 = arith.constant 0 : index
    %c128 = arith.constant 128 : index
    %40 = vector.load %arg8[%c0_15, %c128] : memref<2x256xf32, #tpu.memory_space<vmem>>, vector<1x128xf32>
    tpu.vector_store %arg8[%c0_15, %c128], %39 {strides = array<i32>} : memref<2x256xf32, #tpu.memory_space<vmem>>, vector<1x128xf32>,
    %c2_i32_16 = arith.constant 2 : i32
    %41 = arith.muli %arg0, %c2_i32_16 : i32
    %c1_i32 = arith.constant 1 : i32
    %42 = arith.addi %41, %c1_i32 : i32
    %43 = arith.index_cast %42 : i32 to index
    %44 = memref.load %arg1[%43] : memref<10xi32, #tpu.memory_space<smem>>
    %45 = arith.index_cast %42 : i32 to index
    %46 = memref.load %arg2[%45] : memref<10xi32, #tpu.memory_space<smem>>
    %c1 = arith.constant 1 : index
    %c0_17 = arith.constant 0 : index
    %47 = vector.load %arg8[%c1, %c0_17] : memref<2x256xf32, #tpu.memory_space<vmem>>, vector<1x256xf32>
    %48 = arith.index_cast %44 : i32 to index
    %c0_18 = arith.constant 0 : index
    %c0_19 = arith.constant 0 : index
    %49 = vector.load %arg4[%48, %c0_18, %c0_19] : memref<4x256x256xf32, #tpu.memory_space<vmem>>, vector<1x256x256xf32>
    %50 = vector.shape_cast %49 : vector<1x256x256xf32> to vector<256x256xf32>
    %cst_20 = arith.constant dense<0.000000e+00> : vector<1x256xf32>
    %51 = tpu.matmul %47, %50, %cst_20 {dimension_numbers = #tpu.dot_dimension_numbers<[1], [0], [0], [1], [0, 0, 1, 1], [], []>} : vector<1x256xf32>, vector<256x256xf32>, vector<1x256xf32> -> vector<1x256xf32>
    %52 = vector.extract_strided_slice %51 {offsets = [0, 0], sizes = [1, 128], strides = [1, 1]} : vector<1x256xf32> to vector<1x128xf32>
    %53 = vector.extract_strided_slice %51 {offsets = [0, 128], sizes = [1, 128], strides = [1, 1]} : vector<1x256xf32> to vector<1x128xf32>
    %54 = arith.mulf %52, %52 : vector<1x128xf32>
    %55 = arith.mulf %53, %53 : vector<1x128xf32>
    %56 = arith.addf %54, %55 : vector<1x128xf32>
    %c0_21 = arith.constant 0 : index
    %c0_22 = arith.constant 0 : index
    %57 = vector.load %arg5[%c0_21, %c0_22] : memref<128x128xf32, #tpu.memory_space<vmem>>, vector<128x128xf32>
    %cst_23 = arith.constant dense<0.000000e+00> : vector<1x128xf32>
    %58 = tpu.matmul %56, %57, %cst_23 {dimension_numbers = #tpu.dot_dimension_numbers<[1], [0], [0], [1], [0, 0, 1, 1], [], []>} : vector<1x128xf32>, vector<128x128xf32>, vector<1x128xf32> -> vector<1x128xf32>
    %59 = tpu.concatenate %52, %53 in 0 : vector<1x128xf32>, vector<1x128xf32> -> vector<2x128xf32>
    %60 = arith.index_cast %46 : i32 to index
    %c0_24 = arith.constant 0 : index
    %c0_25 = arith.constant 0 : index
    %61 = vector.load %arg6[%60, %c0_24, %c0_25] : memref<4x128x128xf32, #tpu.memory_space<vmem>>, vector<1x128x128xf32>
    %62 = vector.shape_cast %61 : vector<1x128x128xf32> to vector<128x128xf32>
    %cst_26 = arith.constant dense<0.000000e+00> : vector<2x128xf32>
    %63 = tpu.matmul %59, %62, %cst_26 {dimension_numbers = #tpu.dot_dimension_numbers<[1], [0], [0], [1], [0, 0, 1, 1], [], []>} : vector<2x128xf32>, vector<128x128xf32>, vector<2x128xf32> -> vector<2x128xf32>
    %64 = arith.mulf %63, %63 : vector<2x128xf32>
    %65 = vector.shape_cast %64 : vector<2x128xf32> to vector<1x2x128xf32>
    %cst_27 = arith.constant dense<0.000000e+00> : vector<1xf32>
    %66 = vector.multi_reduction <add>, %65, %cst_27 [1, 2] : vector<1x2x128xf32> to vector<1xf32>
    %67 = vector.shape_cast %66 : vector<1xf32> to vector<1x1x1xf32>
    %68 = vector.extract %67[0, 0, 0] : f32 from vector<1x1x1xf32>
    %cst_28 = arith.constant 1.000000e-30 : f32
    %69 = arith.maximumf %68, %cst_28 : f32
    %70 = math.rsqrt %69 : f32
    %71 = vector.extract_strided_slice %63 {offsets = [0, 0], sizes = [1, 128], strides = [1, 1]} : vector<2x128xf32> to vector<1x128xf32>
    %72 = vector.broadcast %70 : f32 to vector<1x128xf32>
    %73 = arith.mulf %71, %72 : vector<1x128xf32>
    %c1_29 = arith.constant 1 : index
    %c0_30 = arith.constant 0 : index
    %74 = vector.load %arg8[%c1_29, %c0_30] : memref<2x256xf32, #tpu.memory_space<vmem>>, vector<1x128xf32>
    tpu.vector_store %arg8[%c1_29, %c0_30], %73 {strides = array<i32>} : memref<2x256xf32, #tpu.memory_space<vmem>>, vector<1x128xf32>,
    %75 = vector.extract_strided_slice %63 {offsets = [1, 0], sizes = [1, 128], strides = [1, 1]} : vector<2x128xf32> to vector<1x128xf32>
    %76 = vector.broadcast %70 : f32 to vector<1x128xf32>
    %77 = arith.mulf %75, %76 : vector<1x128xf32>
    %c1_31 = arith.constant 1 : index
    %c128_32 = arith.constant 128 : index
    %78 = vector.load %arg8[%c1_31, %c128_32] : memref<2x256xf32, #tpu.memory_space<vmem>>, vector<1x128xf32>
    tpu.vector_store %arg8[%c1_31, %c128_32], %77 {strides = array<i32>} : memref<2x256xf32, #tpu.memory_space<vmem>>, vector<1x128xf32>,
    %79 = tpu.concatenate %20, %58 in 0 : vector<1x128xf32>, vector<1x128xf32> -> vector<2x128xf32>
    %80 = vector.shape_cast %79 : vector<2x128xf32> to vector<1x2x128xf32>
    %c0_33 = arith.constant 0 : index
    %c0_34 = arith.constant 0 : index
    %c0_35 = arith.constant 0 : index
    %81 = vector.load %arg7[%c0_33, %c0_34, %c0_35] : memref<1x2x128xf32, #tpu.memory_space<vmem>>, vector<1x2x128xf32>
    tpu.vector_store %arg7[%c0_33, %c0_34, %c0_35], %80 {strides = array<i32>} : memref<1x2x128xf32, #tpu.memory_space<vmem>>, vector<1x2x128xf32>,
    return
  }
  func.func @transform_0(%arg0: i32, %arg1: memref<10xi32, #tpu.memory_space<smem>>, %arg2: memref<10xi32, #tpu.memory_space<smem>>) -> (i32, i32) {
    %c0_i32 = arith.constant 0 : i32
    %c0_i32_0 = arith.constant 0 : i32
    %c0_i32_1 = arith.constant 0 : i32
    return %c0_i32, %c0_i32_0 : i32, i32
  }
  func.func @transform_1(%arg0: i32, %arg1: memref<10xi32, #tpu.memory_space<smem>>, %arg2: memref<10xi32, #tpu.memory_space<smem>>) -> (i32, i32, i32) {
    %c0_i32 = arith.constant 0 : i32
    %c0_i32_0 = arith.constant 0 : i32
    %c0_i32_1 = arith.constant 0 : i32
    %c0_i32_2 = arith.constant 0 : i32
    return %c0_i32, %c0_i32_0, %c0_i32_1 : i32, i32, i32
  }
  func.func @transform_2(%arg0: i32, %arg1: memref<10xi32, #tpu.memory_space<smem>>, %arg2: memref<10xi32, #tpu.memory_space<smem>>) -> (i32, i32) {
    %c0_i32 = arith.constant 0 : i32
    %c0_i32_0 = arith.constant 0 : i32
    %c0_i32_1 = arith.constant 0 : i32
    return %c0_i32, %c0_i32_0 : i32, i32
  }
  func.func @transform_3(%arg0: i32, %arg1: memref<10xi32, #tpu.memory_space<smem>>, %arg2: memref<10xi32, #tpu.memory_space<smem>>) -> (i32, i32, i32) {
    %c0_i32 = arith.constant 0 : i32
    %c0_i32_0 = arith.constant 0 : i32
    %c0_i32_1 = arith.constant 0 : i32
    %c0_i32_2 = arith.constant 0 : i32
    return %c0_i32, %c0_i32_0, %c0_i32_1 : i32, i32, i32
  }
  func.func @transform_4(%arg0: i32, %arg1: memref<10xi32, #tpu.memory_space<smem>>, %arg2: memref<10xi32, #tpu.memory_space<smem>>) -> (i32, i32, i32) {
    %c0_i32 = arith.constant 0 : i32
    %c0_i32_0 = arith.constant 0 : i32
    %c0_i32_1 = arith.constant 0 : i32
    return %arg0, %c0_i32, %c0_i32_0 : i32, i32, i32
  }
  func.func @transform_5(%arg0: i32, %arg1: memref<10xi32, #tpu.memory_space<smem>>, %arg2: memref<10xi32, #tpu.memory_space<smem>>) -> (i32, i32) {
    %c0_i32 = arith.constant 0 : i32
    %c0_i32_0 = arith.constant 0 : i32
    %c0_i32_1 = arith.constant 0 : i32
    return %c0_i32, %c0_i32_0 : i32, i32
  }
}

</mosaic_0001>

<llo_original>
// kernel: tpu_custom_call.1
$region0: #{tpu_custom_call.1}
  #allocation0 [shape = 'u32[]', space=smem, size = 0x4, offset = 0x4, fixed_abs, tag = 'smem constant byte address 0x4 - core index']
  #allocation1 [shape = 'u32[144,128]{1,0:T(1,128)}', space=vmem, size = 0x12000, scoped, tag = 'internal scratch']
  #allocation2 [shape = 's32[1]{0}', space=sflag, size = 0x4, scoped, tag = 'scoped memory for tpu_custom_call.1']
  #allocation3 [shape = 'u8[512]{0}', space=smem, size = 0x200, scoped, tag = 'prefetched SMEM operand 0']
  #allocation4 [shape = 'u8[512]{0}', space=smem, size = 0x200, scoped, tag = 'prefetched SMEM operand 1']
  %s0 = inlined_call_operand.hbm [shape: s32[10], index: 0, kind: input, shape index: {}]
  %s1 = inlined_call_operand.vmem [shape: s32[10], index: 1, kind: input, shape index: {}]
  %s2 = inlined_call_operand.vmem [shape: f32[2,256], index: 2, kind: input, shape index: {}]
  %s3 = inlined_call_operand.hbm [shape: f32[4,256,256], index: 3, kind: input, shape index: {}]
  %s4 = inlined_call_operand.hbm [shape: f32[128,128], index: 4, kind: input, shape index: {}]
  %s5 = inlined_call_operand.hbm [shape: f32[4,128,128], index: 5, kind: input, shape index: {}]
  %s6 = inlined_call_operand.hbm [shape: f32[5,2,128], index: 6, kind: output, shape index: {0}]
  %s7 = inlined_call_operand.hbm [shape: f32[2,256], index: 7, kind: output, shape index: {1}]
  %8 = xla_tuple %s6, %s7
  %s9 = sld [smem:[#allocation0]]
  $region73: #{tpu_custom_call.1} parent=0
    _
  %s11 = ssub.s32 1, %s9
  %s12 = scalar_select 0, %s11, %s9
  %14 = dma.hbm_to_smem %s0, 16, [#allocation3], [#allocation2]
  %s15 = sshll.u32 %s1, 4
  %s16 = int_to_ptr.vmem [resolvable:$true] %s15
  %18 = dma.vmem_to_smem %s16, 16, [#allocation4], [#allocation2]
  %19 = dma.done [#allocation2], 32
  %20 = sfence
  $region1: #{tpu_custom_call.1} parent=0
    #allocation5 [shape = 'u8[1048576]{0}', space=vmem, size = 0x100000, scoped, tag = 'input window, operand 3, single buffered']
    #allocation6 [shape = 's32[2]{0}', space=sflag, size = 0x8, scoped, tag = 'scoped memory for tpu_custom_call.1']
    #allocation7 [shape = 's32[2]{0}', space=sflag, size = 0x8, scoped, tag = 'scoped memory for tpu_custom_call.1']
    #allocation8 [shape = 'u8[65536]{0}', space=vmem, size = 0x10000, scoped, tag = 'input window, operand 4, single buffered']
    #allocation9 [shape = 's32[1]{0}', space=sflag, size = 0x4, scoped, tag = 'scoped memory for tpu_custom_call.1']
    #allocation10 [shape = 'u8[262144]{0}', space=vmem, size = 0x40000, scoped, tag = 'input window, operand 5, single buffered']
    #allocation11 [shape = 'u8[2048]{0}', space=vmem, size = 0x800, scoped, tag = 'output window, operand 0']
    #allocation12 [shape = 'u8[2048]{0}', space=vmem, size = 0x800, scoped, tag = 'output window, operand 1, single buffered']
    #allocation13 [shape = 's32[1]{0}', space=sflag, size = 0x4, scoped, tag = 'scoped memory for tpu_custom_call.1']
    %21 = vsyncpa [#allocation6], 0
    %22 = vsyncpa [#allocation9], 0
    %23 = vsyncpa [#allocation7], 0
    %s24 = scalar_lea.sflag [#allocation7], 1
    %25 = vsyncpa %s24, 0
    %26 = vsyncpa [#allocation13], 0
    loop: start=0, step=1, limit=7
    $region2: #{tpu_custom_call.1} parent=1 // loop_pre_header
      _
    $region3: #{tpu_custom_call.1} parent=1 // loop_header
      %s28 = sphi 0, %s32
      %p29 = scmp.ge.s32.totalorder %s28, 7
      %s36 = sphi 0, %s36
      %s38 = sphi 0, %s36
      %s39 = sphi 0, %s38
      %s53 = sphi 0, %s39
      %s57 = sphi 0, %s57
      %s59 = sphi 0, %s57
      %s60 = sphi 0, %s59
      %s74 = sphi 0, %s60
      %s78 = sphi 0, %s78
      %s80 = sphi 0, %s78
      %s81 = sphi 0, %s80
      %s95 = sphi 0, %s81
      %s99 = sphi 0, %s99
      %s101 = sphi 0, %s99
      %s102 = sphi 0, %s101
      %s116 = sphi 0, %s102
      %s122 = sphi 0, %s124
      %s125 = sphi 0, %s122
      %s126 = sphi 0, %s125
      %s142 = sphi 0, %s126
      %s146 = sphi 0, %s146
      %s148 = sphi 0, %s146
      %s149 = sphi 0, %s148
      %s163 = sphi 0, %s149
    $region4: #{tpu_custom_call.1} parent=1 // loop_header_branch
      %31 = sbr.rel (%p29) target = $region8
    $region5: #{tpu_custom_call.1} parent=1 // loop_body
      %s33 = ssub.s32 %s28, 1
      %s34 = ssub.s32 %s28, 2
      %s35 = sadd.s32 %s28, 1
      %s37 = sadd.s32 %s36, 1
      %p40 = scmp.eq.s32.totalorder %s28, 4
      %p41 = scmp.ne.s32.totalorder %s36, %s38
      %p42 = scmp.eq.s32.totalorder %s28, 0
      %p43 = por %p41, %p42
      %p44 = scmp.ne.s32.totalorder %s36, %s38
      %p45 = scmp.eq.s32.totalorder %s33, 4
      %p46 = por %p44, %p45
      %p47 = scmp.ne.s32.totalorder %s38, %s39
      %p48 = scmp.eq.s32.totalorder %s33, 0
      %p49 = por %p47, %p48
      %p50 = scmp.ne.s32.totalorder %s38, %s39
      %p51 = scmp.eq.s32.totalorder %s34, 4
      %p52 = por %p50, %p51
      %p54 = scmp.ne.s32.totalorder %s39, %s53
      %p55 = scmp.eq.s32.totalorder %s34, 0
      %p56 = por %p54, %p55
      %s58 = sadd.s32 %s57, 1
      %p61 = scmp.eq.s32.totalorder %s28, 4
      %p62 = scmp.ne.s32.totalorder %s57, %s59
      %p63 = scmp.eq.s32.totalorder %s28, 0
      %p64 = por %p62, %p63
      %p65 = scmp.ne.s32.totalorder %s57, %s59
      %p66 = scmp.eq.s32.totalorder %s33, 4
      %p67 = por %p65, %p66
      %p68 = scmp.ne.s32.totalorder %s59, %s60
      %p69 = scmp.eq.s32.totalorder %s33, 0
      %p70 = por %p68, %p69
      %p71 = scmp.ne.s32.totalorder %s59, %s60
      %p72 = scmp.eq.s32.totalorder %s34, 4
      %p73 = por %p71, %p72
      %p75 = scmp.ne.s32.totalorder %s60, %s74
      %p76 = scmp.eq.s32.totalorder %s34, 0
      %p77 = por %p75, %p76
      %s79 = sadd.s32 %s78, 1
      %p82 = scmp.eq.s32.totalorder %s28, 4
      %p83 = scmp.ne.s32.totalorder %s78, %s80
      %p84 = scmp.eq.s32.totalorder %s28, 0
      %p85 = por %p83, %p84
      %p86 = scmp.ne.s32.totalorder %s78, %s80
      %p87 = scmp.eq.s32.totalorder %s33, 4
      %p88 = por %p86, %p87
      %p89 = scmp.ne.s32.totalorder %s80, %s81
      %p90 = scmp.eq.s32.totalorder %s33, 0
      %p91 = por %p89, %p90
      %p92 = scmp.ne.s32.totalorder %s80, %s81
      %p93 = scmp.eq.s32.totalorder %s34, 4
      %p94 = por %p92, %p93
      %p96 = scmp.ne.s32.totalorder %s81, %s95
      %p97 = scmp.eq.s32.totalorder %s34, 0
      %p98 = por %p96, %p97
      %s100 = sadd.s32 %s99, 1
      %p103 = scmp.eq.s32.totalorder %s28, 4
      %p104 = scmp.ne.s32.totalorder %s99, %s101
      %p105 = scmp.eq.s32.totalorder %s28, 0
      %p106 = por %p104, %p105
      %p107 = scmp.ne.s32.totalorder %s99, %s101
      %p108 = scmp.eq.s32.totalorder %s33, 4
      %p109 = por %p107, %p108
      %p110 = scmp.ne.s32.totalorder %s101, %s102
      %p111 = scmp.eq.s32.totalorder %s33, 0
      %p112 = por %p110, %p111
      %p113 = scmp.ne.s32.totalorder %s101, %s102
      %p114 = scmp.eq.s32.totalorder %s34, 4
      %p115 = por %p113, %p114
      %p117 = scmp.ne.s32.totalorder %s102, %s116
      %p118 = scmp.eq.s32.totalorder %s34, 0
      %p119 = por %p117, %p118
      %s120 = ssub.s32 %s28, %s35
      %p121 = scmp.eq.s32.totalorder %s120, 0
      %s123 = sadd.s32 %s122, 1
      %s124 = scalar_select %p121, %s122, %s123
      %p127 = pneg %p121
      %p128 = scmp.eq.s32.totalorder %s28, 4
      %p129 = por %p127, %p128
      %p130 = scmp.ne.s32.totalorder %s122, %s125
      %p131 = scmp.eq.s32.totalorder %s28, 0
      %p132 = por %p130, %p131
      %p133 = scmp.ne.s32.totalorder %s122, %s125
      %p134 = scmp.eq.s32.totalorder %s33, 4
      %p135 = por %p133, %p134
      %p136 = scmp.ne.s32.totalorder %s125, %s126
      %p137 = scmp.eq.s32.totalorder %s33, 0
      %p138 = por %p136, %p137
      %p139 = scmp.ne.s32.totalorder %s125, %s126
      %p140 = scmp.eq.s32.totalorder %s34, 4
      %p141 = por %p139, %p140
      %p143 = scmp.ne.s32.totalorder %s126, %s142
      %p144 = scmp.eq.s32.totalorder %s34, 0
      %p145 = por %p143, %p144
      %s147 = sadd.s32 %s146, 1
      %p150 = scmp.eq.s32.totalorder %s28, 4
      %p151 = scmp.ne.s32.totalorder %s146, %s148
      %p152 = scmp.eq.s32.totalorder %s28, 0
      %p153 = por %p151, %p152
      %p154 = scmp.ne.s32.totalorder %s146, %s148
      %p155 = scmp.eq.s32.totalorder %s33, 4
      %p156 = por %p154, %p155
      %p157 = scmp.ne.s32.totalorder %s148, %s149
      %p158 = scmp.eq.s32.totalorder %s33, 0
      %p159 = por %p157, %p158
      %p160 = scmp.ne.s32.totalorder %s148, %s149
      %p161 = scmp.eq.s32.totalorder %s34, 4
      %p162 = por %p160, %p161
      %p164 = scmp.ne.s32.totalorder %s149, %s163
      %p165 = scmp.eq.s32.totalorder %s34, 0
      %p166 = por %p164, %p165
      %p167 = scmp.le.s32.totalorder 1, %s28
      %p168 = scmp.lt.s32.totalorder %s28, 6
      %p169 = pnand %p167, %p168
      %p170 = pneg %p169
      // Predicated region
      $region9: #{tpu_custom_call.1} parent=5 // pred_check
        _
      $region10: #{tpu_custom_call.1} parent=5 // pred_check_branch
        %172 = sbr.rel (%p169) target = $region12
      $region11: #{tpu_custom_call.1} parent=5 // pred_region
        %s173 = ssub.s32 %s28, 1
        // Predicated region
        $region13: #{tpu_custom_call.1} parent=11 // pred_check
          %p174 = pneg %p49
        $region14: #{tpu_custom_call.1} parent=11 // pred_check_branch
          %176 = sbr.rel (%p174) target = $region16
        $region15: #{tpu_custom_call.1} parent=11 // pred_region
          _
        $region16: #{tpu_custom_call.1} parent=11 // pred_fallthru
          _
        // Predicated region
        $region17: #{tpu_custom_call.1} parent=11 // pred_check
          %p177 = pneg %p70
        $region18: #{tpu_custom_call.1} parent=11 // pred_check_branch
          %179 = sbr.rel (%p177) target = $region20
        $region19: #{tpu_custom_call.1} parent=11 // pred_region
          %s181 = ssub.s32 32768, 32768
          %182 = vsyncadd [#allocation6], %s181
          %s183 = sshll.u32 [#allocation5], 4
          %s184 = int_to_ptr.vmem [resolvable:$true] %s183
          %189 = dma.hbm_to_vmem [thread:$0]  %s3, 32768, %s184, [#allocation6], 256, 256, 16
        $region20: #{tpu_custom_call.1} parent=11 // pred_fallthru
          _
        // Predicated region
        $region21: #{tpu_custom_call.1} parent=11 // pred_check
          %p190 = pneg %p91
        $region22: #{tpu_custom_call.1} parent=11 // pred_check_branch
          %192 = sbr.rel (%p190) target = $region24
        $region23: #{tpu_custom_call.1} parent=11 // pred_region
          %s194 = ssub.s32 2048, 2048
          %195 = vsyncadd [#allocation9], %s194
          %s196 = sshll.u32 [#allocation8], 4
          %s197 = int_to_ptr.vmem [resolvable:$true] %s196
          %202 = dma.hbm_to_vmem [thread:$0]  %s4, 2048, %s197, [#allocation9], 128, 128, 8
        $region24: #{tpu_custom_call.1} parent=11 // pred_fallthru
          _
        // Predicated region
        $region25: #{tpu_custom_call.1} parent=11 // pred_check
          %p203 = pneg %p112
        $region26: #{tpu_custom_call.1} parent=11 // pred_check_branch
          %205 = sbr.rel (%p203) target = $region28
        $region27: #{tpu_custom_call.1} parent=11 // pred_region
          %s207 = ssub.s32 8192, 8192
          %208 = vsyncadd [#allocation9], %s207
          %s209 = sshll.u32 [#allocation10], 4
          %s210 = int_to_ptr.vmem [resolvable:$true] %s209
          %215 = dma.hbm_to_vmem [thread:$0]  %s5, 8192, %s210, [#allocation9], 128, 128, 8
        $region28: #{tpu_custom_call.1} parent=11 // pred_fallthru
          _
      $region12: #{tpu_custom_call.1} parent=5 // pred_fallthru
        _
      %p216 = scmp.lt.s32.totalorder %s28, 5
      // Predicated region
      $region29: #{tpu_custom_call.1} parent=5 // pred_check
        %p217 = pneg %p216
      $region30: #{tpu_custom_call.1} parent=5 // pred_check_branch
        %219 = sbr.rel (%p217) target = $region32
      $region31: #{tpu_custom_call.1} parent=5 // pred_region
        _
      $region32: #{tpu_custom_call.1} parent=5 // pred_fallthru
        _
      %p220 = scmp.le.s32.totalorder 1, %s28
      %p221 = scmp.lt.s32.totalorder %s28, 6
      %p222 = pnand %p220, %p221
      %p223 = pneg %p222
      // Predicated region
      $region33: #{tpu_custom_call.1} parent=5 // pred_check
        _
      $region34: #{tpu_custom_call.1} parent=5 // pred_check_branch
        %225 = sbr.rel (%p222) target = $region36
      $region35: #{tpu_custom_call.1} parent=5 // pred_region
        %s226 = ssub.s32 %s28, 1
        // Predicated region
        $region37: #{tpu_custom_call.1} parent=35 // pred_check
          %p227 = pneg %p70
        $region38: #{tpu_custom_call.1} parent=35 // pred_check_branch
          %229 = sbr.rel (%p227) target = $region40
        $region39: #{tpu_custom_call.1} parent=35 // pred_region
          %230 = dma.done [#allocation6], 32768
        $region40: #{tpu_custom_call.1} parent=35 // pred_fallthru
          _
        // Predicated region
        $region41: #{tpu_custom_call.1} parent=35 // pred_check
          %p231 = pneg %p91
        $region42: #{tpu_custom_call.1} parent=35 // pred_check_branch
          %233 = sbr.rel (%p231) target = $region44
        $region43: #{tpu_custom_call.1} parent=35 // pred_region
          %234 = dma.done [#allocation9], 2048
        $region44: #{tpu_custom_call.1} parent=35 // pred_fallthru
          _
        // Predicated region
        $region45: #{tpu_custom_call.1} parent=35 // pred_check
          %p235 = pneg %p112
        $region46: #{tpu_custom_call.1} parent=35 // pred_check_branch
          %237 = sbr.rel (%p235) target = $region48
        $region47: #{tpu_custom_call.1} parent=35 // pred_region
          %238 = dma.done [#allocation9], 8192
        $region48: #{tpu_custom_call.1} parent=35 // pred_fallthru
          _
        %p239 = pneg %p49
        %p240 = pneg %p46
        %p241 = pneg %p70
        %p242 = pneg %p67
        %p243 = pneg %p91
        %p244 = pneg %p88
        %p245 = pneg %p112
        %p246 = pneg %p109
        %p247 = pneg %p138
        %p248 = pneg %p135
        %s249 = sand.u32 %s125, 1
        %s250 = scalar_lea.sflag [#allocation7], %s249
        %s251 = sand.u32 %s125, 1
        %s252 = smul.addr %s251, 2
        %s253 = scalar_lea.vmem [#allocation11], %s252
        %p254 = pneg %p159
        %p255 = pneg %p156
        %p256 = scmp.eq.s32.totalorder %s33, 0
        // Predicated region
        $region49: #{tpu_custom_call.1} parent=35 // pred_check
          %p257 = pneg %p256
        $region50: #{tpu_custom_call.1} parent=35 // pred_check_branch
          %259 = sbr.rel (%p257) target = $region52
        $region51: #{tpu_custom_call.1} parent=35 // pred_region
          %v260 = vld [vmem:[%s2] sm:$0xf]
          %261 = vst [vmem:[#allocation12] sm:$0xf] %v260
        $region52: #{tpu_custom_call.1} parent=35 // pred_fallthru
          _
        %s262 = smul.u32 %s33, 2
        %s263 = sld [smem:[#allocation3 + %s262]]
        %s264 = sld [smem:[#allocation4 + %s262]]
        %v265 = vld [vmem:[#allocation12] ss:$2 sm:$0x3]
        %s266 = smul.u32 %s263, 64
        %s267 = smul.addr %s266, 8
        %s268 = scalar_lea.vmem [#allocation5], %s267
        %v269 = vld [vmem:[%s268] sm:$0xff]
        %v270 = vld [vmem:[%s268 + $0x8] sm:$0xff]
        %v271 = vld [vmem:[%s268 + $0x10] sm:$0xff]
        %v272 = vld [vmem:[%s268 + $0x18] sm:$0xff]
        %v273 = vld [vmem:[%s268 + $0x20] sm:$0xff]
        %v274 = vld [vmem:[%s268 + $0x28] sm:$0xff]
        %v275 = vld [vmem:[%s268 + $0x30] sm:$0xff]
        %v276 = vld [vmem:[%s268 + $0x38] sm:$0xff]
        %v277 = vld [vmem:[%s268 + $0x40] sm:$0xff]
        %v278 = vld [vmem:[%s268 + $0x48] sm:$0xff]
        %v279 = vld [vmem:[%s268 + $0x50] sm:$0xff]
        %v280 = vld [vmem:[%s268 + $0x58] sm:$0xff]
        %v281 = vld [vmem:[%s268 + $0x60] sm:$0xff]
        %v282 = vld [vmem:[%s268 + $0x68] sm:$0xff]
        %v283 = vld [vmem:[%s268 + $0x70] sm:$0xff]
        %v284 = vld [vmem:[%s268 + $0x78] sm:$0xff]
        %v285 = vld [vmem:[%s268 + $0x80] sm:$0xff]
        %v286 = vld [vmem:[%s268 + $0x88] sm:$0xff]
        %v287 = vld [vmem:[%s268 + $0x90] sm:$0xff]
        %v288 = vld [vmem:[%s268 + $0x98] sm:$0xff]
        %v289 = vld [vmem:[%s268 + $0xa0] sm:$0xff]
        %v290 = vld [vmem:[%s268 + $0xa8] sm:$0xff]
        %v291 = vld [vmem:[%s268 + $0xb0] sm:$0xff]
        %v292 = vld [vmem:[%s268 + $0xb8] sm:$0xff]
        %v293 = vld [vmem:[%s268 + $0xc0] sm:$0xff]
        %v294 = vld [vmem:[%s268 + $0xc8] sm:$0xff]
        %v295 = vld [vmem:[%s268 + $0xd0] sm:$0xff]
        %v296 = vld [vmem:[%s268 + $0xd8] sm:$0xff]
        %v297 = vld [vmem:[%s268 + $0xe0] sm:$0xff]
        %v298 = vld [vmem:[%s268 + $0xe8] sm:$0xff]
        %v299 = vld [vmem:[%s268 + $0xf0] sm:$0xff]
        %v300 = vld [vmem:[%s268 + $0xf8] sm:$0xff]
        %v301 = vld [vmem:[%s268 + $0x100] sm:$0xff]
        %v302 = vld [vmem:[%s268 + $0x108] sm:$0xff]
        %v303 = vld [vmem:[%s268 + $0x110] sm:$0xff]
        %v304 = vld [vmem:[%s268 + $0x118] sm:$0xff]
        %v305 = vld [vmem:[%s268 + $0x120] sm:$0xff]
        %v306 = vld [vmem:[%s268 + $0x128] sm:$0xff]
        %v307 = vld [vmem:[%s268 + $0x130] sm:$0xff]
        %v308 = vld [vmem:[%s268 + $0x138] sm:$0xff]
        %v309 = vld [vmem:[%s268 + $0x140] sm:$0xff]
        %v310 = vld [vmem:[%s268 + $0x148] sm:$0xff]
        %v311 = vld [vmem:[%s268 + $0x150] sm:$0xff]
        %v312 = vld [vmem:[%s268 + $0x158] sm:$0xff]
        %v313 = vld [vmem:[%s268 + $0x160] sm:$0xff]
        %v314 = vld [vmem:[%s268 + $0x168] sm:$0xff]
        %v315 = vld [vmem:[%s268 + $0x170] sm:$0xff]
        %v316 = vld [vmem:[%s268 + $0x178] sm:$0xff]
        %v317 = vld [vmem:[%s268 + $0x180] sm:$0xff]
        %v318 = vld [vmem:[%s268 + $0x188] sm:$0xff]
        %v319 = vld [vmem:[%s268 + $0x190] sm:$0xff]
        %v320 = vld [vmem:[%s268 + $0x198] sm:$0xff]
        %v321 = vld [vmem:[%s268 + $0x1a0] sm:$0xff]
        %v322 = vld [vmem:[%s268 + $0x1a8] sm:$0xff]
        %v323 = vld [vmem:[%s268 + $0x1b0] sm:$0xff]
        %v324 = vld [vmem:[%s268 + $0x1b8] sm:$0xff]
        %v325 = vld [vmem:[%s268 + $0x1c0] sm:$0xff]
        %v326 = vld [vmem:[%s268 + $0x1c8] sm:$0xff]
        %v327 = vld [vmem:[%s268 + $0x1d0] sm:$0xff]
        %v328 = vld [vmem:[%s268 + $0x1d8] sm:$0xff]
        %v329 = vld [vmem:[%s268 + $0x1e0] sm:$0xff]
        %v330 = vld [vmem:[%s268 + $0x1e8] sm:$0xff]
        %v331 = vld [vmem:[%s268 + $0x1f0] sm:$0xff]
        %v332 = vld [vmem:[%s268 + $0x1f8] sm:$0xff]
        %v334 = vlaneseq
        %v335 = vshrl.u32 %v334, 7
        %v336 = vsub.s32 0, %v335
        %v337 = vrot.slane %v265, %v336
        %v338 = vlaneseq
        %v339 = vshrl.u32 %v338, 7
        %v340 = vsub.s32 1, %v339
        %v341 = vrot.slane %v265, %v340
        %344 = vmatprep.subr.mxu0 %v270
        %345 = vmatpush1.msra.mxu0 %v269
        %346 = vmatprep.subr.mxu0 %v272
        %347 = vmatpush1.msra.mxu0 %v271
        %348 = vmatprep.subr.mxu0 %v274
        %349 = vmatpush1.msra.mxu0 %v273
        %350 = vmatprep.subr.mxu0 %v276
        %351 = vmatpush1.msra.mxu0 %v275
        %352 = vmatprep.subr.mxu0 %v278
        %353 = vmatpush1.msra.mxu0 %v277
        %354 = vmatprep.subr.mxu0 %v280
        %355 = vmatpush1.msra.mxu0 %v279
        %356 = vmatprep.subr.mxu0 %v282
        %357 = vmatpush1.msra.mxu0 %v281
        %358 = vmatprep.subr.mxu0 %v284
        %359 = vmatpush1.msra.mxu0 %v283
        %360 = vmatprep.subr.mxu0 %v286
        %361 = vmatpush1.msra.mxu0 %v285
        %362 = vmatprep.subr.mxu0 %v288
        %363 = vmatpush1.msra.mxu0 %v287
        %364 = vmatprep.subr.mxu0 %v290
        %365 = vmatpush1.msra.mxu0 %v289
        %366 = vmatprep.subr.mxu0 %v292
        %367 = vmatpush1.msra.mxu0 %v291
        %368 = vmatprep.subr.mxu0 %v294
        %369 = vmatpush1.msra.mxu0 %v293
        %370 = vmatprep.subr.mxu0 %v296
        %371 = vmatpush1.msra.mxu0 %v295
        %372 = vmatprep.subr.mxu0 %v298
        %373 = vmatpush1.msra.mxu0 %v297
        %374 = vmatprep.subr.mxu0 %v300
        %375 = vmatpush1.msra.mxu0 %v299
        %376 = vmatprep.subr.mxu0 %v302
        %377 = vmatpush1.msra.mxu0 %v301
        %378 = vmatprep.subr.mxu0 %v304
        %379 = vmatpush1.msra.mxu0 %v303
        %380 = vmatprep.subr.mxu0 %v306
        %381 = vmatpush1.msra.mxu0 %v305
        %382 = vmatprep.subr.mxu0 %v308
        %383 = vmatpush1.msra.mxu0 %v307
        %384 = vmatprep.subr.mxu0 %v310
        %385 = vmatpush1.msra.mxu0 %v309
        %386 = vmatprep.subr.mxu0 %v312
        %387 = vmatpush1.msra.mxu0 %v311
        %388 = vmatprep.subr.mxu0 %v314
        %389 = vmatpush1.msra.mxu0 %v313
        %390 = vmatprep.subr.mxu0 %v316
        %391 = vmatpush1.msra.mxu0 %v315
        %392 = vmatprep.subr.mxu0 %v318
        %393 = vmatpush1.msra.mxu0 %v317
        %394 = vmatprep.subr.mxu0 %v320
        %395 = vmatpush1.msra.mxu0 %v319
        %396 = vmatprep.subr.mxu0 %v322
        %397 = vmatpush1.msra.mxu0 %v321
        %398 = vmatprep.subr.mxu0 %v324
        %399 = vmatpush1.msra.mxu0 %v323
        %400 = vmatprep.subr.mxu0 %v326
        %401 = vmatpush1.msra.mxu0 %v325
        %402 = vmatprep.subr.mxu0 %v328
        %403 = vmatpush1.msra.mxu0 %v327
        %404 = vmatprep.subr.mxu0 %v330
        %405 = vmatpush1.msra.mxu0 %v329
        %406 = vmatprep.subr.mxu0 %v332
        %407 = vmatpush1.msra.mxu0 %v331
        %408 = vmatprep.mubr.f32.mxu0 %v341
        %409 = vmatmul.mubr.f32.gmra.mrb[0].mxu0 %v337
        %v410 = vpop.f32.mrb[0].mxu0
        %v411 = vadd.f32 0.0, %v410
        %v412 = vpop.f32.mrb[0].mxu0
        %v413 = vadd.f32 0.0, %v412
        %414 = vdwg.mxu0
        %v415 = vmul.f32 %v411, %v411
        %v416 = vmul.f32 %v413, %v413
        %v417 = vadd.f32 %v415, %v416
        %v418 = vld [vmem:[#allocation8] sm:$0xff]
        %v419 = vld [vmem:[#allocation8 + $0x8] sm:$0xff]
        %v420 = vld [vmem:[#allocation8 + $0x10] sm:$0xff]
        %v421 = vld [vmem:[#allocation8 + $0x18] sm:$0xff]
        %v422 = vld [vmem:[#allocation8 + $0x20] sm:$0xff]
        %v423 = vld [vmem:[#allocation8 + $0x28] sm:$0xff]
        %v424 = vld [vmem:[#allocation8 + $0x30] sm:$0xff]
        %v425 = vld [vmem:[#allocation8 + $0x38] sm:$0xff]
        %v426 = vld [vmem:[#allocation8 + $0x40] sm:$0xff]
        %v427 = vld [vmem:[#allocation8 + $0x48] sm:$0xff]
        %v428 = vld [vmem:[#allocation8 + $0x50] sm:$0xff]
        %v429 = vld [vmem:[#allocation8 + $0x58] sm:$0xff]
        %v430 = vld [vmem:[#allocation8 + $0x60] sm:$0xff]
        %v431 = vld [vmem:[#allocation8 + $0x68] sm:$0xff]
        %v432 = vld [vmem:[#allocation8 + $0x70] sm:$0xff]
        %v433 = vld [vmem:[#allocation8 + $0x78] sm:$0xff]
        %434 = vmatprep.subr.mxu0 0.0
        %435 = vmatpush1.msra.mxu0 %v418
        %436 = vmatprep.subr.mxu0 0.0
        %437 = vmatpush1.msra.mxu0 %v419
        %438 = vmatprep.subr.mxu0 0.0
        %439 = vmatpush1.msra.mxu0 %v420
        %440 = vmatprep.subr.mxu0 0.0
        %441 = vmatpush1.msra.mxu0 %v421
        %442 = vmatprep.subr.mxu0 0.0
        %443 = vmatpush1.msra.mxu0 %v422
        %444 = vmatprep.subr.mxu0 0.0
        %445 = vmatpush1.msra.mxu0 %v423
        %446 = vmatprep.subr.mxu0 0.0
        %447 = vmatpush1.msra.mxu0 %v424
        %448 = vmatprep.subr.mxu0 0.0
        %449 = vmatpush1.msra.mxu0 %v425
        %450 = vmatprep.subr.mxu0 0.0
        %451 = vmatpush1.msra.mxu0 %v426
        %452 = vmatprep.subr.mxu0 0.0
        %453 = vmatpush1.msra.mxu0 %v427
        %454 = vmatprep.subr.mxu0 0.0
        %455 = vmatpush1.msra.mxu0 %v428
        %456 = vmatprep.subr.mxu0 0.0
        %457 = vmatpush1.msra.mxu0 %v429
        %458 = vmatprep.subr.mxu0 0.0
        %459 = vmatpush1.msra.mxu0 %v430
        %460 = vmatprep.subr.mxu0 0.0
        %461 = vmatpush1.msra.mxu0 %v431
        %462 = vmatprep.subr.mxu0 0.0
        %463 = vmatpush1.msra.mxu0 %v432
        %464 = vmatprep.subr.mxu0 0.0
        %465 = vmatpush1.msra.mxu0 %v433
        %466 = vmatprep.subr.mxu0 0.0
        %467 = vmatpush1.msra.mxu0 0.0
        %468 = vmatprep.subr.mxu0 0.0
        %469 = vmatpush1.msra.mxu0 0.0
        %470 = vmatprep.subr.mxu0 0.0
        %471 = vmatpush1.msra.mxu0 0.0
        %472 = vmatprep.subr.mxu0 0.0
        %473 = vmatpush1.msra.mxu0 0.0
        %474 = vmatprep.subr.mxu0 0.0
        %475 = vmatpush1.msra.mxu0 0.0
        %476 = vmatprep.subr.mxu0 0.0
        %477 = vmatpush1.msra.mxu0 0.0
        %478 = vmatprep.subr.mxu0 0.0
        %479 = vmatpush1.msra.mxu0 0.0
        %480 = vmatprep.subr.mxu0 0.0
        %481 = vmatpush1.msra.mxu0 0.0
        %482 = vmatprep.subr.mxu0 0.0
        %483 = vmatpush1.msra.mxu0 0.0
        %484 = vmatprep.subr.mxu0 0.0
        %485 = vmatpush1.msra.mxu0 0.0
        %486 = vmatprep.subr.mxu0 0.0
        %487 = vmatpush1.msra.mxu0 0.0
        %488 = vmatprep.subr.mxu0 0.0
        %489 = vmatpush1.msra.mxu0 0.0
        %490 = vmatprep.subr.mxu0 0.0
        %491 = vmatpush1.msra.mxu0 0.0
        %492 = vmatprep.subr.mxu0 0.0
        %493 = vmatpush1.msra.mxu0 0.0
        %494 = vmatprep.subr.mxu0 0.0
        %495 = vmatpush1.msra.mxu0 0.0
        %496 = vmatprep.subr.mxu0 0.0
        %497 = vmatpush1.msra.mxu0 0.0
        %498 = vmatprep.mubr.f32.mxu0 0.0
        %499 = vmatmul.mubr.f32.gmra.mrb[0].mxu0 %v417
        %v500 = vpop.f32.mrb[0].mxu0
        %v501 = vadd.f32 0.0, %v500
        %v502 = vpop.f32.mrb[0].mxu0
        %503 = vdwg.mxu0
        %v505 = vrot.slane %v413, 7
        %vm507 = vcmask 1040384
        %v508 = vsel %vm507, %v411, %v505
        %s509 = smul.u32 %s264, 128
        %s510 = scalar_lea.vmem [#allocation10], %s509
        %v511 = vld [vmem:[%s510] sm:$0xff]
        %v512 = vld [vmem:[%s510 + $0x8] sm:$0xff]
        %v513 = vld [vmem:[%s510 + $0x10] sm:$0xff]
        %v514 = vld [vmem:[%s510 + $0x18] sm:$0xff]
        %v515 = vld [vmem:[%s510 + $0x20] sm:$0xff]
        %v516 = vld [vmem:[%s510 + $0x28] sm:$0xff]
        %v517 = vld [vmem:[%s510 + $0x30] sm:$0xff]
        %v518 = vld [vmem:[%s510 + $0x38] sm:$0xff]
        %v519 = vld [vmem:[%s510 + $0x40] sm:$0xff]
        %v520 = vld [vmem:[%s510 + $0x48] sm:$0xff]
        %v521 = vld [vmem:[%s510 + $0x50] sm:$0xff]
        %v522 = vld [vmem:[%s510 + $0x58] sm:$0xff]
        %v523 = vld [vmem:[%s510 + $0x60] sm:$0xff]
        %v524 = vld [vmem:[%s510 + $0x68] sm:$0xff]
        %v525 = vld [vmem:[%s510 + $0x70] sm:$0xff]
        %v526 = vld [vmem:[%s510 + $0x78] sm:$0xff]
        %527 = vmatprep.subr.mxu0 0.0
        %528 = vmatpush1.msra.mxu0 %v511
        %529 = vmatprep.subr.mxu0 0.0
        %530 = vmatpush1.msra.mxu0 %v512
        %531 = vmatprep.subr.mxu0 0.0
        %532 = vmatpush1.msra.mxu0 %v513
        %533 = vmatprep.subr.mxu0 0.0
        %534 = vmatpush1.msra.mxu0 %v514
        %535 = vmatprep.subr.mxu0 0.0
        %536 = vmatpush1.msra.mxu0 %v515
        %537 = vmatprep.subr.mxu0 0.0
        %538 = vmatpush1.msra.mxu0 %v516
        %539 = vmatprep.subr.mxu0 0.0
        %540 = vmatpush1.msra.mxu0 %v517
        %541 = vmatprep.subr.mxu0 0.0
        %542 = vmatpush1.msra.mxu0 %v518
        %543 = vmatprep.subr.mxu0 0.0
        %544 = vmatpush1.msra.mxu0 %v519
        %545 = vmatprep.subr.mxu0 0.0
        %546 = vmatpush1.msra.mxu0 %v520
        %547 = vmatprep.subr.mxu0 0.0
        %548 = vmatpush1.msra.mxu0 %v521
        %549 = vmatprep.subr.mxu0 0.0
        %550 = vmatpush1.msra.mxu0 %v522
        %551 = vmatprep.subr.mxu0 0.0
        %552 = vmatpush1.msra.mxu0 %v523
        %553 = vmatprep.subr.mxu0 0.0
        %554 = vmatpush1.msra.mxu0 %v524
        %555 = vmatprep.subr.mxu0 0.0
        %556 = vmatpush1.msra.mxu0 %v525
        %557 = vmatprep.subr.mxu0 0.0
        %558 = vmatpush1.msra.mxu0 %v526
        %559 = vmatprep.subr.mxu0 0.0
        %560 = vmatpush1.msra.mxu0 0.0
        %561 = vmatprep.subr.mxu0 0.0
        %562 = vmatpush1.msra.mxu0 0.0
        %563 = vmatprep.subr.mxu0 0.0
        %564 = vmatpush1.msra.mxu0 0.0
        %565 = vmatprep.subr.mxu0 0.0
        %566 = vmatpush1.msra.mxu0 0.0
        %567 = vmatprep.subr.mxu0 0.0
        %568 = vmatpush1.msra.mxu0 0.0
        %569 = vmatprep.subr.mxu0 0.0
        %570 = vmatpush1.msra.mxu0 0.0
        %571 = vmatprep.subr.mxu0 0.0
        %572 = vmatpush1.msra.mxu0 0.0
        %573 = vmatprep.subr.mxu0 0.0
        %574 = vmatpush1.msra.mxu0 0.0
        %575 = vmatprep.subr.mxu0 0.0
        %576 = vmatpush1.msra.mxu0 0.0
        %577 = vmatprep.subr.mxu0 0.0
        %578 = vmatpush1.msra.mxu0 0.0
        %579 = vmatprep.subr.mxu0 0.0
        %580 = vmatpush1.msra.mxu0 0.0
        %581 = vmatprep.subr.mxu0 0.0
        %582 = vmatpush1.msra.mxu0 0.0
        %583 = vmatprep.subr.mxu0 0.0
        %584 = vmatpush1.msra.mxu0 0.0
        %585 = vmatprep.subr.mxu0 0.0
        %586 = vmatpush1.msra.mxu0 0.0
        %587 = vmatprep.subr.mxu0 0.0
        %588 = vmatpush1.msra.mxu0 0.0
        %589 = vmatprep.subr.mxu0 0.0
        %590 = vmatpush1.msra.mxu0 0.0
        %591 = vmatprep.mubr.f32.mxu0 0.0
        %592 = vmatmul.mubr.f32.gmra.mrb[0].mxu0 %v508
        %v593 = vpop.f32.mrb[0].mxu0
        %v594 = vadd.f32 0.0, %v593
        %v595 = vpop.f32.mrb[0].mxu0
        %596 = vdwg.mxu0
        %v597 = vmul.f32 %v594, %v594
        %vm598 = vcmask 1041408
        %v599 = vsel %vm598, %v597, 0.0
        %600 = vadd.xlane.f32.xlu0 %v599
        %v601 = vpop.xlane.xlu0 %600
        %v602 = vrot.slane %v601, 4
        %v603 = vadd.f32 %v601, %v602
        %v604 = vrot.slane %v603, 2
        %v605 = vadd.f32 %v603, %v604
        %v606 = vrot.slane %v605, 1
        %v607 = vadd.f32 %v605, %v606
        %s608 = vtos %v607
        %s609 = smax.f32 %s608, 1e-30
        %v610 = vstv %s609
        %v611 = vrsqrt.pop %v610
        %s612 = vtos %v611
        %v613 = vstv %s612
        %v614 = vmul.f32 %v594, %v613
        %615 = vst [vmem:[#allocation12] sm:$0x1] %v614
        %v618 = vunpack.c.l.s4 1983009808
        %v619 = vunpack.c.0.s8 %v618
        %v620 = vlaneseq
        %v621 = vshrl.u32 %v620, 7
        %v622 = vsub.s32 %v619, %v621
        %v623 = vrot.slane %v614, %v622
        %v624 = vrot.slane %v623, 7
        %v625 = vrot.slane %v624, 2
        %627 = vst [vmem:[#allocation12 + $0x2] sm:$0x1] %v625
        %s628 = sadd.s32 %s262, 1
        %s629 = sld [smem:[#allocation3 + %s628]]
        %s630 = sld [smem:[#allocation4 + %s628]]
        %s631 = scalar_lea.vmem [#allocation12], 1
        %v632 = vld [vmem:[%s631] ss:$2 sm:$0x3]
        %s633 = smul.u32 %s629, 64
        %s634 = smul.addr %s633, 8
        %s635 = scalar_lea.vmem [#allocation5], %s634
        %v636 = vld [vmem:[%s635] sm:$0xff]
        %v637 = vld [vmem:[%s635 + $0x8] sm:$0xff]
        %v638 = vld [vmem:[%s635 + $0x10] sm:$0xff]
        %v639 = vld [vmem:[%s635 + $0x18] sm:$0xff]
        %v640 = vld [vmem:[%s635 + $0x20] sm:$0xff]
        %v641 = vld [vmem:[%s635 + $0x28] sm:$0xff]
        %v642 = vld [vmem:[%s635 + $0x30] sm:$0xff]
        %v643 = vld [vmem:[%s635 + $0x38] sm:$0xff]
        %v644 = vld [vmem:[%s635 + $0x40] sm:$0xff]
        %v645 = vld [vmem:[%s635 + $0x48] sm:$0xff]
        %v646 = vld [vmem:[%s635 + $0x50] sm:$0xff]
        %v647 = vld [vmem:[%s635 + $0x58] sm:$0xff]
        %v648 = vld [vmem:[%s635 + $0x60] sm:$0xff]
        %v649 = vld [vmem:[%s635 + $0x68] sm:$0xff]
        %v650 = vld [vmem:[%s635 + $0x70] sm:$0xff]
        %v651 = vld [vmem:[%s635 + $0x78] sm:$0xff]
        %v652 = vld [vmem:[%s635 + $0x80] sm:$0xff]
        %v653 = vld [vmem:[%s635 + $0x88] sm:$0xff]
        %v654 = vld [vmem:[%s635 + $0x90] sm:$0xff]
        %v655 = vld [vmem:[%s635 + $0x98] sm:$0xff]
        %v656 = vld [vmem:[%s635 + $0xa0] sm:$0xff]
        %v657 = vld [vmem:[%s635 + $0xa8] sm:$0xff]
        %v658 = vld [vmem:[%s635 + $0xb0] sm:$0xff]
        %v659 = vld [vmem:[%s635 + $0xb8] sm:$0xff]
        %v660 = vld [vmem:[%s635 + $0xc0] sm:$0xff]
        %v661 = vld [vmem:[%s635 + $0xc8] sm:$0xff]
        %v662 = vld [vmem:[%s635 + $0xd0] sm:$0xff]
        %v663 = vld [vmem:[%s635 + $0xd8] sm:$0xff]
        %v664 = vld [vmem:[%s635 + $0xe0] sm:$0xff]
        %v665 = vld [vmem:[%s635 + $0xe8] sm:$0xff]
        %v666 = vld [vmem:[%s635 + $0xf0] sm:$0xff]
        %v667 = vld [vmem:[%s635 + $0xf8] sm:$0xff]
        %v668 = vld [vmem:[%s635 + $0x100] sm:$0xff]
        %v669 = vld [vmem:[%s635 + $0x108] sm:$0xff]
        %v670 = vld [vmem:[%s635 + $0x110] sm:$0xff]
        %v671 = vld [vmem:[%s635 + $0x118] sm:$0xff]
        %v672 = vld [vmem:[%s635 + $0x120] sm:$0xff]
        %v673 = vld [vmem:[%s635 + $0x128] sm:$0xff]
        %v674 = vld [vmem:[%s635 + $0x130] sm:$0xff]
        %v675 = vld [vmem:[%s635 + $0x138] sm:$0xff]
        %v676 = vld [vmem:[%s635 + $0x140] sm:$0xff]
        %v677 = vld [vmem:[%s635 + $0x148] sm:$0xff]
        %v678 = vld [vmem:[%s635 + $0x150] sm:$0xff]
        %v679 = vld [vmem:[%s635 + $0x158] sm:$0xff]
        %v680 = vld [vmem:[%s635 + $0x160] sm:$0xff]
        %v681 = vld [vmem:[%s635 + $0x168] sm:$0xff]
        %v682 = vld [vmem:[%s635 + $0x170] sm:$0xff]
        %v683 = vld [vmem:[%s635 + $0x178] sm:$0xff]
        %v684 = vld [vmem:[%s635 + $0x180] sm:$0xff]
        %v685 = vld [vmem:[%s635 + $0x188] sm:$0xff]
        %v686 = vld [vmem:[%s635 + $0x190] sm:$0xff]
        %v687 = vld [vmem:[%s635 + $0x198] sm:$0xff]
        %v688 = vld [vmem:[%s635 + $0x1a0] sm:$0xff]
        %v689 = vld [vmem:[%s635 + $0x1a8] sm:$0xff]
        %v690 = vld [vmem:[%s635 + $0x1b0] sm:$0xff]
        %v691 = vld [vmem:[%s635 + $0x1b8] sm:$0xff]
        %v692 = vld [vmem:[%s635 + $0x1c0] sm:$0xff]
        %v693 = vld [vmem:[%s635 + $0x1c8] sm:$0xff]
        %v694 = vld [vmem:[%s635 + $0x1d0] sm:$0xff]
        %v695 = vld [vmem:[%s635 + $0x1d8] sm:$0xff]
        %v696 = vld [vmem:[%s635 + $0x1e0] sm:$0xff]
        %v697 = vld [vmem:[%s635 + $0x1e8] sm:$0xff]
        %v698 = vld [vmem:[%s635 + $0x1f0] sm:$0xff]
        %v699 = vld [vmem:[%s635 + $0x1f8] sm:$0xff]
        %v701 = vlaneseq
        %v702 = vshrl.u32 %v701, 7
        %v703 = vsub.s32 0, %v702
        %v704 = vrot.slane %v632, %v703
        %v705 = vlaneseq
        %v706 = vshrl.u32 %v705, 7
        %v707 = vsub.s32 1, %v706
        %v708 = vrot.slane %v632, %v707
        %711 = vmatprep.subr.mxu0 %v637
        %712 = vmatpush1.msra.mxu0 %v636
        %713 = vmatprep.subr.mxu0 %v639
        %714 = vmatpush1.msra.mxu0 %v638
        %715 = vmatprep.subr.mxu0 %v641
        %716 = vmatpush1.msra.mxu0 %v640
        %717 = vmatprep.subr.mxu0 %v643
        %718 = vmatpush1.msra.mxu0 %v642
        %719 = vmatprep.subr.mxu0 %v645
        %720 = vmatpush1.msra.mxu0 %v644
        %721 = vmatprep.subr.mxu0 %v647
        %722 = vmatpush1.msra.mxu0 %v646
        %723 = vmatprep.subr.mxu0 %v649
        %724 = vmatpush1.msra.mxu0 %v648
        %725 = vmatprep.subr.mxu0 %v651
        %726 = vmatpush1.msra.mxu0 %v650
        %727 = vmatprep.subr.mxu0 %v653
        %728 = vmatpush1.msra.mxu0 %v652
        %729 = vmatprep.subr.mxu0 %v655
        %730 = vmatpush1.msra.mxu0 %v654
        %731 = vmatprep.subr.mxu0 %v657
        %732 = vmatpush1.msra.mxu0 %v656
        %733 = vmatprep.subr.mxu0 %v659
        %734 = vmatpush1.msra.mxu0 %v658
        %735 = vmatprep.subr.mxu0 %v661
        %736 = vmatpush1.msra.mxu0 %v660
        %737 = vmatprep.subr.mxu0 %v663
        %738 = vmatpush1.msra.mxu0 %v662
        %739 = vmatprep.subr.mxu0 %v665
        %740 = vmatpush1.msra.mxu0 %v664
        %741 = vmatprep.subr.mxu0 %v667
        %742 = vmatpush1.msra.mxu0 %v666
        %743 = vmatprep.subr.mxu0 %v669
        %744 = vmatpush1.msra.mxu0 %v668
        %745 = vmatprep.subr.mxu0 %v671
        %746 = vmatpush1.msra.mxu0 %v670
        %747 = vmatprep.subr.mxu0 %v673
        %748 = vmatpush1.msra.mxu0 %v672
        %749 = vmatprep.subr.mxu0 %v675
        %750 = vmatpush1.msra.mxu0 %v674
        %751 = vmatprep.subr.mxu0 %v677
        %752 = vmatpush1.msra.mxu0 %v676
        %753 = vmatprep.subr.mxu0 %v679
        %754 = vmatpush1.msra.mxu0 %v678
        %755 = vmatprep.subr.mxu0 %v681
        %756 = vmatpush1.msra.mxu0 %v680
        %757 = vmatprep.subr.mxu0 %v683
        %758 = vmatpush1.msra.mxu0 %v682
        %759 = vmatprep.subr.mxu0 %v685
        %760 = vmatpush1.msra.mxu0 %v684
        %761 = vmatprep.subr.mxu0 %v687
        %762 = vmatpush1.msra.mxu0 %v686
        %763 = vmatprep.subr.mxu0 %v689
        %764 = vmatpush1.msra.mxu0 %v688
        %765 = vmatprep.subr.mxu0 %v691
        %766 = vmatpush1.msra.mxu0 %v690
        %767 = vmatprep.subr.mxu0 %v693
        %768 = vmatpush1.msra.mxu0 %v692
        %769 = vmatprep.subr.mxu0 %v695
        %770 = vmatpush1.msra.mxu0 %v694
        %771 = vmatprep.subr.mxu0 %v697
        %772 = vmatpush1.msra.mxu0 %v696
        %773 = vmatprep.subr.mxu0 %v699
        %774 = vmatpush1.msra.mxu0 %v698
        %775 = vmatprep.mubr.f32.mxu0 %v708
        %776 = vmatmul.mubr.f32.gmra.mrb[0].mxu0 %v704
        %v777 = vpop.f32.mrb[0].mxu0
        %v778 = vadd.f32 0.0, %v777
        %v779 = vpop.f32.mrb[0].mxu0
        %v780 = vadd.f32 0.0, %v779
        %781 = vdwg.mxu0
        %v782 = vmul.f32 %v778, %v778
        %v783 = vmul.f32 %v780, %v780
        %v784 = vadd.f32 %v782, %v783
        %v785 = vld [vmem:[#allocation8] sm:$0xff]
        %v786 = vld [vmem:[#allocation8 + $0x8] sm:$0xff]
        %v787 = vld [vmem:[#allocation8 + $0x10] sm:$0xff]
        %v788 = vld [vmem:[#allocation8 + $0x18] sm:$0xff]
        %v789 = vld [vmem:[#allocation8 + $0x20] sm:$0xff]
        %v790 = vld [vmem:[#allocation8 + $0x28] sm:$0xff]
        %v791 = vld [vmem:[#allocation8 + $0x30] sm:$0xff]
        %v792 = vld [vmem:[#allocation8 + $0x38] sm:$0xff]
        %v793 = vld [vmem:[#allocation8 + $0x40] sm:$0xff]
        %v794 = vld [vmem:[#allocation8 + $0x48] sm:$0xff]
        %v795 = vld [vmem:[#allocation8 + $0x50] sm:$0xff]
        %v796 = vld [vmem:[#allocation8 + $0x58] sm:$0xff]
        %v797 = vld [vmem:[#allocation8 + $0x60] sm:$0xff]
        %v798 = vld [vmem:[#allocation8 + $0x68] sm:$0xff]
        %v799 = vld [vmem:[#allocation8 + $0x70] sm:$0xff]
        %v800 = vld [vmem:[#allocation8 + $0x78] sm:$0xff]
        %801 = vmatprep.subr.mxu0 0.0
        %802 = vmatpush1.msra.mxu0 %v785
        %803 = vmatprep.subr.mxu0 0.0
        %804 = vmatpush1.msra.mxu0 %v786
        %805 = vmatprep.subr.mxu0 0.0
        %806 = vmatpush1.msra.mxu0 %v787
        %807 = vmatprep.subr.mxu0 0.0
        %808 = vmatpush1.msra.mxu0 %v788
        %809 = vmatprep.subr.mxu0 0.0
        %810 = vmatpush1.msra.mxu0 %v789
        %811 = vmatprep.subr.mxu0 0.0
        %812 = vmatpush1.msra.mxu0 %v790
        %813 = vmatprep.subr.mxu0 0.0
        %814 = vmatpush1.msra.mxu0 %v791
        %815 = vmatprep.subr.mxu0 0.0
        %816 = vmatpush1.msra.mxu0 %v792
        %817 = vmatprep.subr.mxu0 0.0
        %818 = vmatpush1.msra.mxu0 %v793
        %819 = vmatprep.subr.mxu0 0.0
        %820 = vmatpush1.msra.mxu0 %v794
        %821 = vmatprep.subr.mxu0 0.0
        %822 = vmatpush1.msra.mxu0 %v795
        %823 = vmatprep.subr.mxu0 0.0
        %824 = vmatpush1.msra.mxu0 %v796
        %825 = vmatprep.subr.mxu0 0.0
        %826 = vmatpush1.msra.mxu0 %v797
        %827 = vmatprep.subr.mxu0 0.0
        %828 = vmatpush1.msra.mxu0 %v798
        %829 = vmatprep.subr.mxu0 0.0
        %830 = vmatpush1.msra.mxu0 %v799
        %831 = vmatprep.subr.mxu0 0.0
        %832 = vmatpush1.msra.mxu0 %v800
        %833 = vmatprep.subr.mxu0 0.0
        %834 = vmatpush1.msra.mxu0 0.0
        %835 = vmatprep.subr.mxu0 0.0
        %836 = vmatpush1.msra.mxu0 0.0
        %837 = vmatprep.subr.mxu0 0.0
        %838 = vmatpush1.msra.mxu0 0.0
        %839 = vmatprep.subr.mxu0 0.0
        %840 = vmatpush1.msra.mxu0 0.0
        %841 = vmatprep.subr.mxu0 0.0
        %842 = vmatpush1.msra.mxu0 0.0
        %843 = vmatprep.subr.mxu0 0.0
        %844 = vmatpush1.msra.mxu0 0.0
        %845 = vmatprep.subr.mxu0 0.0
        %846 = vmatpush1.msra.mxu0 0.0
        %847 = vmatprep.subr.mxu0 0.0
        %848 = vmatpush1.msra.mxu0 0.0
        %849 = vmatprep.subr.mxu0 0.0
        %850 = vmatpush1.msra.mxu0 0.0
        %851 = vmatprep.subr.mxu0 0.0
        %852 = vmatpush1.msra.mxu0 0.0
        %853 = vmatprep.subr.mxu0 0.0
        %854 = vmatpush1.msra.mxu0 0.0
        %855 = vmatprep.subr.mxu0 0.0
        %856 = vmatpush1.msra.mxu0 0.0
        %857 = vmatprep.subr.mxu0 0.0
        %858 = vmatpush1.msra.mxu0 0.0
        %859 = vmatprep.subr.mxu0 0.0
        %860 = vmatpush1.msra.mxu0 0.0
        %861 = vmatprep.subr.mxu0 0.0
        %862 = vmatpush1.msra.mxu0 0.0
        %863 = vmatprep.subr.mxu0 0.0
        %864 = vmatpush1.msra.mxu0 0.0
        %865 = vmatprep.mubr.f32.mxu0 0.0
        %866 = vmatmul.mubr.f32.gmra.mrb[0].mxu0 %v784
        %v867 = vpop.f32.mrb[0].mxu0
        %v868 = vadd.f32 0.0, %v867
        %v869 = vpop.f32.mrb[0].mxu0
        %870 = vdwg.mxu0
        %v872 = vrot.slane %v780, 7
        %v874 = vsel %vm507, %v778, %v872
        %s875 = smul.u32 %s630, 128
        %s876 = scalar_lea.vmem [#allocation10], %s875
        %v877 = vld [vmem:[%s876] sm:$0xff]
        %v878 = vld [vmem:[%s876 + $0x8] sm:$0xff]
        %v879 = vld [vmem:[%s876 + $0x10] sm:$0xff]
        %v880 = vld [vmem:[%s876 + $0x18] sm:$0xff]
        %v881 = vld [vmem:[%s876 + $0x20] sm:$0xff]
        %v882 = vld [vmem:[%s876 + $0x28] sm:$0xff]
        %v883 = vld [vmem:[%s876 + $0x30] sm:$0xff]
        %v884 = vld [vmem:[%s876 + $0x38] sm:$0xff]
        %v885 = vld [vmem:[%s876 + $0x40] sm:$0xff]
        %v886 = vld [vmem:[%s876 + $0x48] sm:$0xff]
        %v887 = vld [vmem:[%s876 + $0x50] sm:$0xff]
        %v888 = vld [vmem:[%s876 + $0x58] sm:$0xff]
        %v889 = vld [vmem:[%s876 + $0x60] sm:$0xff]
        %v890 = vld [vmem:[%s876 + $0x68] sm:$0xff]
        %v891 = vld [vmem:[%s876 + $0x70] sm:$0xff]
        %v892 = vld [vmem:[%s876 + $0x78] sm:$0xff]
        %893 = vmatprep.subr.mxu0 0.0
        %894 = vmatpush1.msra.mxu0 %v877
        %895 = vmatprep.subr.mxu0 0.0
        %896 = vmatpush1.msra.mxu0 %v878
        %897 = vmatprep.subr.mxu0 0.0
        %898 = vmatpush1.msra.mxu0 %v879
        %899 = vmatprep.subr.mxu0 0.0
        %900 = vmatpush1.msra.mxu0 %v880
        %901 = vmatprep.subr.mxu0 0.0
        %902 = vmatpush1.msra.mxu0 %v881
        %903 = vmatprep.subr.mxu0 0.0
        %904 = vmatpush1.msra.mxu0 %v882
        %905 = vmatprep.subr.mxu0 0.0
        %906 = vmatpush1.msra.mxu0 %v883
        %907 = vmatprep.subr.mxu0 0.0
        %908 = vmatpush1.msra.mxu0 %v884
        %909 = vmatprep.subr.mxu0 0.0
        %910 = vmatpush1.msra.mxu0 %v885
        %911 = vmatprep.subr.mxu0 0.0
        %912 = vmatpush1.msra.mxu0 %v886
        %913 = vmatprep.subr.mxu0 0.0
        %914 = vmatpush1.msra.mxu0 %v887
        %915 = vmatprep.subr.mxu0 0.0
        %916 = vmatpush1.msra.mxu0 %v888
        %917 = vmatprep.subr.mxu0 0.0
        %918 = vmatpush1.msra.mxu0 %v889
        %919 = vmatprep.subr.mxu0 0.0
        %920 = vmatpush1.msra.mxu0 %v890
        %921 = vmatprep.subr.mxu0 0.0
        %922 = vmatpush1.msra.mxu0 %v891
        %923 = vmatprep.subr.mxu0 0.0
        %924 = vmatpush1.msra.mxu0 %v892
        %925 = vmatprep.subr.mxu0 0.0
        %926 = vmatpush1.msra.mxu0 0.0
        %927 = vmatprep.subr.mxu0 0.0
        %928 = vmatpush1.msra.mxu0 0.0
        %929 = vmatprep.subr.mxu0 0.0
        %930 = vmatpush1.msra.mxu0 0.0
        %931 = vmatprep.subr.mxu0 0.0
        %932 = vmatpush1.msra.mxu0 0.0
        %933 = vmatprep.subr.mxu0 0.0
        %934 = vmatpush1.msra.mxu0 0.0
        %935 = vmatprep.subr.mxu0 0.0
        %936 = vmatpush1.msra.mxu0 0.0
        %937 = vmatprep.subr.mxu0 0.0
        %938 = vmatpush1.msra.mxu0 0.0
        %939 = vmatprep.subr.mxu0 0.0
        %940 = vmatpush1.msra.mxu0 0.0
        %941 = vmatprep.subr.mxu0 0.0
        %942 = vmatpush1.msra.mxu0 0.0
        %943 = vmatprep.subr.mxu0 0.0
        %944 = vmatpush1.msra.mxu0 0.0
        %945 = vmatprep.subr.mxu0 0.0
        %946 = vmatpush1.msra.mxu0 0.0
        %947 = vmatprep.subr.mxu0 0.0
        %948 = vmatpush1.msra.mxu0 0.0
        %949 = vmatprep.subr.mxu0 0.0
        %950 = vmatpush1.msra.mxu0 0.0
        %951 = vmatprep.subr.mxu0 0.0
        %952 = vmatpush1.msra.mxu0 0.0
        %953 = vmatprep.subr.mxu0 0.0
        %954 = vmatpush1.msra.mxu0 0.0
        %955 = vmatprep.subr.mxu0 0.0
        %956 = vmatpush1.msra.mxu0 0.0
        %957 = vmatprep.mubr.f32.mxu0 0.0
        %958 = vmatmul.mubr.f32.gmra.mrb[0].mxu0 %v874
        %v959 = vpop.f32.mrb[0].mxu0
        %v960 = vadd.f32 0.0, %v959
        %v961 = vpop.f32.mrb[0].mxu0
        %962 = vdwg.mxu0
        %v963 = vmul.f32 %v960, %v960
        %v964 = vsel %vm598, %v963, 0.0
        %965 = vadd.xlane.f32.xlu0 %v964
        %v966 = vpop.xlane.xlu0 %965
        %v967 = vrot.slane %v966, 4
        %v968 = vadd.f32 %v966, %v967
        %v969 = vrot.slane %v968, 2
        %v970 = vadd.f32 %v968, %v969
        %v971 = vrot.slane %v970, 1
        %v972 = vadd.f32 %v970, %v971
        %s973 = vtos %v972
        %s974 = smax.f32 %s973, 1e-30
        %v975 = vstv %s974
        %v976 = vrsqrt.pop %v975
        %s977 = vtos %v976
        %v978 = vstv %s977
        %v979 = vmul.f32 %v960, %v978
        %980 = vst [vmem:[#allocation12 + $0x1] sm:$0x1] %v979
        %v983 = vunpack.c.l.s4 1983009808
        %v984 = vunpack.c.0.s8 %v983
        %v985 = vlaneseq
        %v986 = vshrl.u32 %v985, 7
        %v987 = vsub.s32 %v984, %v986
        %v988 = vrot.slane %v979, %v987
        %v989 = vrot.slane %v988, 7
        %v990 = vrot.slane %v989, 2
        %992 = vst [vmem:[#allocation12 + $0x3] sm:$0x1] %v990
        %v994 = vrot.slane %v868, 7
        %v996 = vsel %vm507, %v501, %v994
        %997 = vst [vmem:[%s253] sm:$0x3] %v996
        %s998 = sand.u32 %s125, 1
        %s999 = scalar_lea.sflag [#allocation7], %s998
        %s1000 = sand.u32 %s125, 1
        %s1001 = smul.addr %s1000, 2
        %s1002 = scalar_lea.vmem [#allocation11], %s1001
        // Predicated region
        $region53: #{tpu_custom_call.1} parent=35 // pred_check
          %p1003 = pneg %p135
        $region54: #{tpu_custom_call.1} parent=35 // pred_check_branch
          %1005 = sbr.rel (%p1003) target = $region56
        $region55: #{tpu_custom_call.1} parent=35 // pred_region
          %s1007 = ssub.s32 32, 32
          %1008 = vsyncadd %s999, %s1007
          %s1009 = smul.addr %s33, 32
          %s1010 = scalar_lea.hbm %s6, %s1009
          %s1012 = sshll.u32 %s1002, 4
          %s1013 = int_to_ptr.vmem [resolvable:$true] %s1012
          %1015 = dma.vmem_to_hbm [thread:$0]  %s1013, 32, %s1010, %s999
        $region56: #{tpu_custom_call.1} parent=35 // pred_fallthru
          _
        // Predicated region
        $region57: #{tpu_custom_call.1} parent=35 // pred_check
          %p1016 = pneg %p156
        $region58: #{tpu_custom_call.1} parent=35 // pred_check_branch
          %1018 = sbr.rel (%p1016) target = $region60
        $region59: #{tpu_custom_call.1} parent=35 // pred_region
          %s1020 = ssub.s32 64, 64
          %1021 = vsyncadd [#allocation13], %s1020
          %s1023 = sshll.u32 [#allocation12], 4
          %s1024 = int_to_ptr.vmem [resolvable:$true] %s1023
          %1026 = dma.vmem_to_hbm [thread:$0]  %s1024, 64, %s7, [#allocation13]
        $region60: #{tpu_custom_call.1} parent=35 // pred_fallthru
          _
        // Predicated region
        $region61: #{tpu_custom_call.1} parent=35 // pred_check
          %p1027 = pneg %p156
        $region62: #{tpu_custom_call.1} parent=35 // pred_check_branch
          %1029 = sbr.rel (%p1027) target = $region64
        $region63: #{tpu_custom_call.1} parent=35 // pred_region
          %1030 = dma.done [#allocation13], 64
        $region64: #{tpu_custom_call.1} parent=35 // pred_fallthru
          _
      $region36: #{tpu_custom_call.1} parent=5 // pred_fallthru
        _
      %p1031 = scmp.le.s32.totalorder 2, %s28
      // Predicated region
      $region65: #{tpu_custom_call.1} parent=5 // pred_check
        %p1032 = pneg %p1031
      $region66: #{tpu_custom_call.1} parent=5 // pred_check_branch
        %1034 = sbr.rel (%p1032) target = $region68
      $region67: #{tpu_custom_call.1} parent=5 // pred_region
        %s1035 = ssub.s32 %s28, 2
        // Predicated region
        $region69: #{tpu_custom_call.1} parent=67 // pred_check
          %p1036 = pneg %p141
        $region70: #{tpu_custom_call.1} parent=67 // pred_check_branch
          %1038 = sbr.rel (%p1036) target = $region72
        $region71: #{tpu_custom_call.1} parent=67 // pred_region
          %s1039 = sand.u32 %s126, 1
          %s1040 = scalar_lea.sflag [#allocation7], %s1039
          %s1041 = sand.u32 %s126, 1
          %s1042 = smul.addr %s1041, 2
          %s1043 = scalar_lea.vmem [#allocation11], %s1042
          %1044 = dma.done %s1040, 32
        $region72: #{tpu_custom_call.1} parent=67 // pred_fallthru
          _
      $region68: #{tpu_custom_call.1} parent=5 // pred_fallthru
        _
    $region6: #{tpu_custom_call.1} parent=1 // loop_footer
      %s32 = sadd.s32 1, %s28
    $region7: #{tpu_custom_call.1} parent=1 // loop_footer_branch
      %27 = sbr.rel target = $region3
    $region8: #{tpu_custom_call.1} parent=1 // loop_exit
      _
    %1045 = vsyncpa [#allocation6], 1
    %s1046 = scalar_lea.sflag [#allocation6], 1
    %1047 = vsyncpa %s1046, 1
    %1048 = vsyncpa [#allocation9], 1
    %1049 = vsyncpa [#allocation7], 1
    %s1050 = scalar_lea.sflag [#allocation7], 1
    %1051 = vsyncpa %s1050, 1
    %1052 = vsyncpa [#allocation13], 1

</llo_original>
